<compile_context>
chip_gen: v7x
topology: tpu7x:2x2x1
jax: 0.10.0
libtpu: 0.0.40
codegen_flags: <defaults>
</compile_context>

<pallas_src>
import math

import jax
import jax.numpy as jnp
from jax.experimental import pallas as pl
from jax.experimental.pallas import tpu as pltpu

# ---------------- model config (small, implied by the PyTorch ModelArgs) ----
DIM = 32
N_HEADS = 4
N_KV_HEADS = 2
HEAD_DIM = DIM // N_HEADS            # 8
N_REP = N_HEADS // N_KV_HEADS        # 2
SEQ = 8
BATCH = 2
MULTIPLE_OF = 8
NORM_EPS = 1e-6
ROPE_THETA = 10000.0


def _ffn_hidden(dim, multiple_of):
    hidden = 4 * dim
    hidden = int(2 * hidden / 3)
    return multiple_of * ((hidden + multiple_of - 1) // multiple_of)


FFN_HIDDEN = _ffn_hidden(DIM, MULTIPLE_OF)   # 88
FFN_PAD = 128                                # lane-dense pad for fused w1|w3


# ------------------------------ kernel --------------------------------------
def _rmsnorm(x, w):
    return x * jax.lax.rsqrt(jnp.mean(x * x, axis=-1, keepdims=True) + NORM_EPS) * w


def transformer_block_kernel(x_ref, wqkv_ref, wo_ref, w13_ref, w2_ref,
                             normw_ref, rope_ref, mask_ref, sel_ref, o_ref):
    f32 = jnp.float32
    bf16 = jnp.bfloat16

    x = x_ref[...]                              # (bs, D) f32, bs = B*S
    bs, _ = x.shape
    hd = HEAD_DIM

    # ---------------- attention ----------------
    xn = _rmsnorm(x, normw_ref[0:1, :])          # (bs, D) f32
    xn_bf = xn.astype(bf16)

    # Head-stacked block-diagonal input via precomputed bf16 0/1 selector
    # (no iota / where on the critical path).
    row = jnp.concatenate([xn_bf] * N_HEADS, axis=1)                   # (bs, H*D)
    xn_big = jnp.concatenate([row] * N_HEADS, axis=0) * sel_ref[...]   # (H*bs, H*D)

    # One MXU pass produces [q | rot_half(q) | k | rot_half(k) | v_wide]:
    # scale, repeat_kv, split-half RoPE permutation and the rotate-half
    # companion are folded into the weights; v_wide is block-diagonal across
    # head lane-blocks.
    qkv = jnp.dot(xn_big, wqkv_ref[...], preferred_element_type=f32)   # (H*bs, 4*hd+H*hd)

    cosf = rope_ref[0]                           # (H*bs, hd) = [cos|cos]
    sinf = rope_ref[1]                           #            = [sin|sin]
    q = qkv[:, 0:hd] * cosf + qkv[:, hd:2 * hd] * sinf                 # f32
    k = qkv[:, 2 * hd:3 * hd] * cosf + qkv[:, 3 * hd:4 * hd] * sinf
    v_wide = qkv[:, 4 * hd:]                                           # (H*bs, H*hd)

    # One fused masked score matmul over all (head, batch) blocks + ONE softmax.
    scores = jax.lax.dot_general(q.astype(bf16), k.astype(bf16),
                                 (((1,), (1,)), ((), ())),
                                 preferred_element_type=f32)           # (H*bs, H*bs)
    scores = scores + mask_ref[...]              # additive 0 / -1e30 (f32, static)
    scores = scores - jnp.max(scores, axis=-1, keepdims=True)
    p = jnp.exp(scores)
    row_sum = jnp.sum(p, axis=-1, keepdims=True)

    pv = jnp.dot(p.astype(bf16), v_wide.astype(bf16),
                 preferred_element_type=f32)                           # (H*bs, H*hd)
    pv = pv * pl.reciprocal(row_sum, approx=True)   # normalize the small tensor (EUP)

    # head un-stack: each row's live lane-block differs per head, so summing the
    # aligned sublane blocks yields the head-major-lane concat directly.
    attn_cat = pv[0:bs, :]
    for h in range(1, N_HEADS):
        attn_cat = attn_cat + pv[h * bs:(h + 1) * bs, :]               # (bs, H*hd)

    attn = jnp.dot(attn_cat.astype(bf16), wo_ref[...],
                   preferred_element_type=f32)                         # (bs, D)
    h_res = x + attn                                                   # residual 1

    # ---------------- SwiGLU feed-forward (fused, lane-padded w1|w3) --------
    hn = _rmsnorm(h_res, normw_ref[1:2, :])
    hn_bf = hn.astype(bf16)
    gu = jnp.dot(hn_bf, w13_ref[...], preferred_element_type=f32)      # (bs, 2*FFN_PAD)
    g = gu[:, 0:FFN_PAD]
    u = gu[:, FFN_PAD:2 * FFN_PAD]
    act = (g * jax.nn.sigmoid(g) * u).astype(bf16)                     # SiLU(g) * u
    ff = jnp.dot(act, w2_ref[...], preferred_element_type=f32)         # (bs, D)

    o_ref[...] = (h_res + ff).astype(o_ref.dtype)                      # residual 2


# ------------------------------ wrapper -------------------------------------
@jax.jit
def transformer_block(x, kparams):
    wqkv, wo, w13, w2, normw, rope_cs, attn_mask, sel_mask = kparams
    B, S, D = x.shape
    x2 = x.reshape(B * S, D)                    # merge batch out of the layout

    def vmem():
        return pl.BlockSpec(memory_space=pltpu.MemorySpace.VMEM)

    out = pl.pallas_call(
        transformer_block_kernel,
        out_shape=jax.ShapeDtypeStruct((B * S, D), x.dtype),
        in_specs=[vmem() for _ in range(9)],
        out_specs=vmem(),
    )(x2, wqkv, wo, w13, w2, normw, rope_cs, attn_mask, sel_mask)
    return out.reshape(B, S, D)


# -------------------- parameter prep (done once, not at call time) ----------
def prepare_kernel_params(wq, wk, wv, wo, w1, w2, w3, attn_nw, ffn_nw):
    bf16 = jnp.bfloat16
    half = HEAD_DIM // 2
    # interleaved pairs -> split-half order, so RoPE is a half-width rotate
    perm = jnp.array([0, 2, 4, 6, 1, 3, 5, 7], dtype=jnp.int32)
    scale = 1.0 / math.sqrt(HEAD_DIM)            # folded into wq

    def rot_half_weights(w_h):
        # x @ w_rot == rotate_half(x @ w_h) = [-q2, q1]   (split-half layout)
        return jnp.concatenate([-w_h[..., half:], w_h[..., :half]], axis=-1)

    def headstack(w_h):                          # (D, H, hd) -> (H*D, hd)
        return jnp.transpose(w_h, (1, 0, 2)).reshape(N_HEADS * DIM, HEAD_DIM)

    wq_h = wq.reshape(DIM, N_HEADS, HEAD_DIM)[:, :, perm] * scale
    wk_h = jnp.repeat(wk.reshape(DIM, N_KV_HEADS, HEAD_DIM)[:, :, perm], N_REP, axis=1)
    wv_h = jnp.repeat(wv.reshape(DIM, N_KV_HEADS, HEAD_DIM), N_REP, axis=1)

    # V weights block-diagonal across head lane-blocks: PV output lands directly
    # in head-major lane layout; head un-stack becomes sublane adds.
    wv_wide = jnp.zeros((N_HEADS, DIM, N_HEADS * HEAD_DIM), jnp.float32)
    for h in range(N_HEADS):
        wv_wide = wv_wide.at[h, :, h * HEAD_DIM:(h + 1) * HEAD_DIM].set(wv_h[:, h, :])
    wv_wide = wv_wide.reshape(N_HEADS * DIM, N_HEADS * HEAD_DIM)

    wqkv = jnp.concatenate(
        [headstack(wq_h), headstack(rot_half_weights(wq_h)),
         headstack(wk_h), headstack(rot_half_weights(wk_h)), wv_wide],
        axis=-1).astype(bf16)                    # (H*D, 4*hd + H*hd) = (128, 64)

    # fused, zero-padded SwiGLU weights: one (bs,D)@(D,256) matmul in-kernel
    w1p = jnp.zeros((DIM, FFN_PAD), jnp.float32).at[:, :FFN_HIDDEN].set(w1)
    w3p = jnp.zeros((DIM, FFN_PAD), jnp.float32).at[:, :FFN_HIDDEN].set(w3)
    w13 = jnp.concatenate([w1p, w3p], axis=1).astype(bf16)            # (D, 256)
    w2p = jnp.zeros((FFN_PAD, DIM), jnp.float32).at[:FFN_HIDDEN, :].set(w2).astype(bf16)

    normw = jnp.stack([attn_nw, ffn_nw]).astype(jnp.float32)          # (2, D)

    # full-width RoPE tables (cos|cos, sin|sin), replicated over (head, batch)
    inv_freq = 1.0 / (ROPE_THETA ** (
        jnp.arange(0, HEAD_DIM, 2, dtype=jnp.float32) / HEAD_DIM))
    ang = jnp.outer(jnp.arange(SEQ, dtype=jnp.float32), inv_freq)     # (S, hd/2)
    cosf = jnp.tile(jnp.cos(ang), (N_HEADS * BATCH, 2))               # (H*B*S, hd)
    sinf = jnp.tile(jnp.sin(ang), (N_HEADS * BATCH, 2))
    rope_cs = jnp.stack([cosf, sinf]).astype(jnp.float32)             # (2, H*B*S, hd)

    # precomputed static masks (no in-kernel iota / compare / select)
    hbs = N_HEADS * BATCH * SEQ
    r = jnp.arange(hbs)
    valid = ((r[:, None] // SEQ) == (r[None, :] // SEQ)) & (r[None, :] <= r[:, None])
    attn_mask = jnp.where(valid, 0.0, -1e30).astype(jnp.float32)      # (hbs, hbs)
    c = jnp.arange(N_HEADS * DIM)
    sel_mask = ((r[:, None] // (BATCH * SEQ)) == (c[None, :] // DIM)).astype(bf16)

    return (wqkv, wo.astype(bf16), w13, w2p, normw, rope_cs, attn_mask, sel_mask)


# ---------------------- pure-JAX reference (f32) ----------------------------
def reference_block(x, wq, wk, wv, wo, w1, w2, w3, attn_nw, ffn_nw):
    B, S, D = x.shape

    def rms(v, w):
        return v * jax.lax.rsqrt(jnp.mean(v * v, -1, keepdims=True) + NORM_EPS) * w

    xn = rms(x, attn_nw)
    xq = (xn @ wq).reshape(B, S, N_HEADS, HEAD_DIM)
    xk = (xn @ wk).reshape(B, S, N_KV_HEADS, HEAD_DIM)
    xv = (xn @ wv).reshape(B, S, N_KV_HEADS, HEAD_DIM)

    inv_freq = 1.0 / (ROPE_THETA ** (
        jnp.arange(0, HEAD_DIM, 2, dtype=jnp.float32) / HEAD_DIM))
    ang = jnp.outer(jnp.arange(S, dtype=jnp.float32), inv_freq)
    c = jnp.cos(ang)[None, :, None, :]
    s = jnp.sin(ang)[None, :, None, :]

    def rope(v):
        vr = v.reshape(*v.shape[:-1], HEAD_DIM // 2, 2)
        a, b = vr[..., 0], vr[..., 1]
        return jnp.stack([a * c - b * s, a * s + b * c], -1).reshape(v.shape)

    xq, xk = rope(xq), rope(xk)
    keys = jnp.repeat(xk, N_REP, axis=2)
    vals = jnp.repeat(xv, N_REP, axis=2)

    mask = jnp.where(jnp.arange(S)[None, :] > jnp.arange(S)[:, None], -jnp.inf, 0.0)
    scores = jnp.einsum('bqhd,bkhd->bhqk', xq, keys) / math.sqrt(HEAD_DIM)
    scores = jax.nn.softmax(scores + mask[None, None], axis=-1)
    out = jnp.einsum('bhqk,bkhd->bqhd', scores, vals).reshape(B, S, -1) @ wo

    h = x + out
    hn = rms(h, ffn_nw)
    ff = (jax.nn.silu(hn @ w1) * (hn @ w3)) @ w2
    return h + ff


# ------------------------------ main -----------------------------------------
if __name__ == "__main__":
    key = jax.random.PRNGKey(0)
    ks = jax.random.split(key, 10)
    wscale = 0.05
    wq = wscale * jax.random.normal(ks[0], (DIM, N_HEADS * HEAD_DIM), jnp.float32)
    wk = wscale * jax.random.normal(ks[1], (DIM, N_KV_HEADS * HEAD_DIM), jnp.float32)
    wv = wscale * jax.random.normal(ks[2], (DIM, N_KV_HEADS * HEAD_DIM), jnp.float32)
    wo = wscale * jax.random.normal(ks[3], (N_HEADS * HEAD_DIM, DIM), jnp.float32)
    w1 = wscale * jax.random.normal(ks[4], (DIM, FFN_HIDDEN), jnp.float32)
    w2 = wscale * jax.random.normal(ks[5], (FFN_HIDDEN, DIM), jnp.float32)
    w3 = wscale * jax.random.normal(ks[6], (DIM, FFN_HIDDEN), jnp.float32)
    attn_nw = 1.0 + 0.1 * jax.random.normal(ks[7], (DIM,), jnp.float32)
    ffn_nw = 1.0 + 0.1 * jax.random.normal(ks[8], (DIM,), jnp.float32)

    x = jax.random.normal(ks[9], (BATCH, SEQ, DIM), jnp.float32)

    kparams = prepare_kernel_params(wq, wk, wv, wo, w1, w2, w3, attn_nw, ffn_nw)
    out = transformer_block(x, kparams)
    jax.block_until_ready(out)

    ref = reference_block(x, wq, wk, wv, wo, w1, w2, w3, attn_nw, ffn_nw)
    assert out.shape == (BATCH, SEQ, DIM)
    err = float(jnp.max(jnp.abs(out - ref)))
    # bf16 MXU operands (f32 accumulation) + approx reciprocal -> loose tolerance
    assert jnp.allclose(out, ref, atol=5e-3, rtol=5e-3), f"max abs err {err}"

    print("KERNEL_OK")
</pallas_src>

<mosaic_0001>
module attributes {stable_mosaic.version = 11 : i64} {
  func.func @transformer_block_kernel(%arg0: memref<16x32xf32, #tpu.memory_space<vmem>>, %arg1: memref<128x64xbf16, #tpu.memory_space<vmem>>, %arg2: memref<32x32xbf16, #tpu.memory_space<vmem>>, %arg3: memref<32x256xbf16, #tpu.memory_space<vmem>>, %arg4: memref<128x32xbf16, #tpu.memory_space<vmem>>, %arg5: memref<2x32xf32, #tpu.memory_space<vmem>>, %arg6: memref<2x64x8xf32, #tpu.memory_space<vmem>>, %arg7: memref<64x64xf32, #tpu.memory_space<vmem>>, %arg8: memref<64x128xbf16, #tpu.memory_space<vmem>>, %arg9: memref<16x32xf32, #tpu.memory_space<vmem>>) attributes {dimension_semantics = [], scalar_prefetch = 0 : i64, scratch_operands = 0 : i64, tpu.core_type = #tpu.core_type<tc>} {
    %c0 = arith.constant 0 : index
    %c0_0 = arith.constant 0 : index
    %0 = vector.load %arg0[%c0, %c0_0] : memref<16x32xf32, #tpu.memory_space<vmem>>, vector<16x32xf32>
    %c0_1 = arith.constant 0 : index
    %c0_2 = arith.constant 0 : index
    %1 = vector.load %arg5[%c0_1, %c0_2] : memref<2x32xf32, #tpu.memory_space<vmem>>, vector<1x32xf32>
    %2 = arith.mulf %0, %0 : vector<16x32xf32>
    %cst = arith.constant dense<0.000000e+00> : vector<16xf32>
    %3 = vector.multi_reduction <add>, %2, %cst [1] : vector<16x32xf32> to vector<16xf32>
    %4 = vector.shape_cast %3 : vector<16xf32> to vector<16x1xf32>
    %cst_3 = arith.constant 3.200000e+01 : f32
    %5 = vector.broadcast %cst_3 : f32 to vector<16x1xf32>
    %6 = arith.divf %4, %5 : vector<16x1xf32>
    %cst_4 = arith.constant 9.99999997E-7 : f32
    %7 = vector.broadcast %cst_4 : f32 to vector<16x1xf32>
    %8 = arith.addf %6, %7 : vector<16x1xf32>
    %9 = math.rsqrt %8 : vector<16x1xf32>
    %10 = vector.broadcast %9 : vector<16x1xf32> to vector<16x32xf32>
    %11 = arith.mulf %0, %10 : vector<16x32xf32>
    %12 = vector.broadcast %1 : vector<1x32xf32> to vector<16x32xf32>
    %13 = arith.mulf %11, %12 : vector<16x32xf32>
    %14 = arith.truncf %13 : vector<16x32xf32> to vector<16x32xbf16>
    %15 = tpu.concatenate %14, %14, %14, %14 in 1 : vector<16x32xbf16>, vector<16x32xbf16>, vector<16x32xbf16>, vector<16x32xbf16> -> vector<16x128xbf16>
    %16 = tpu.concatenate %15, %15, %15, %15 in 0 : vector<16x128xbf16>, vector<16x128xbf16>, vector<16x128xbf16>, vector<16x128xbf16> -> vector<64x128xbf16>
    %c0_5 = arith.constant 0 : index
    %c0_6 = arith.constant 0 : index
    %17 = vector.load %arg8[%c0_5, %c0_6] : memref<64x128xbf16, #tpu.memory_space<vmem>>, vector<64x128xbf16>
    %18 = arith.mulf %16, %17 : vector<64x128xbf16>
    %c0_7 = arith.constant 0 : index
    %c0_8 = arith.constant 0 : index
    %19 = vector.load %arg1[%c0_7, %c0_8] : memref<128x64xbf16, #tpu.memory_space<vmem>>, vector<128x64xbf16>
    %cst_9 = arith.constant dense<0.000000e+00> : vector<64x64xf32>
    %20 = tpu.matmul %18, %19, %cst_9 {dimension_numbers = #tpu.dot_dimension_numbers<[1], [0], [0], [1], [0, 0, 1, 1], [], []>} : vector<64x128xbf16>, vector<128x64xbf16>, vector<64x64xf32> -> vector<64x64xf32>
    %c0_10 = arith.constant 0 : index
    %c0_11 = arith.constant 0 : index
    %c0_12 = arith.constant 0 : index
    %21 = vector.load %arg6[%c0_10, %c0_11, %c0_12] : memref<2x64x8xf32, #tpu.memory_space<vmem>>, vector<1x64x8xf32>
    %22 = vector.shape_cast %21 : vector<1x64x8xf32> to vector<64x8xf32>
    %c1 = arith.constant 1 : index
    %c0_13 = arith.constant 0 : index
    %c0_14 = arith.constant 0 : index
    %23 = vector.load %arg6[%c1, %c0_13, %c0_14] : memref<2x64x8xf32, #tpu.memory_space<vmem>>, vector<1x64x8xf32>
    %24 = vector.shape_cast %23 : vector<1x64x8xf32> to vector<64x8xf32>
    %25 = vector.extract_strided_slice %20 {offsets = [0, 0], sizes = [64, 8], strides = [1, 1]} : vector<64x64xf32> to vector<64x8xf32>
    %26 = arith.mulf %25, %22 : vector<64x8xf32>
    %27 = vector.extract_strided_slice %20 {offsets = [0, 8], sizes = [64, 8], strides = [1, 1]} : vector<64x64xf32> to vector<64x8xf32>
    %28 = arith.mulf %27, %24 : vector<64x8xf32>
    %29 = arith.addf %26, %28 : vector<64x8xf32>
    %30 = vector.extract_strided_slice %20 {offsets = [0, 16], sizes = [64, 8], strides = [1, 1]} : vector<64x64xf32> to vector<64x8xf32>
    %31 = arith.mulf %30, %22 : vector<64x8xf32>
    %32 = vector.extract_strided_slice %20 {offsets = [0, 24], sizes = [64, 8], strides = [1, 1]} : vector<64x64xf32> to vector<64x8xf32>
    %33 = arith.mulf %32, %24 : vector<64x8xf32>
    %34 = arith.addf %31, %33 : vector<64x8xf32>
    %35 = vector.extract_strided_slice %20 {offsets = [0, 32], sizes = [64, 32], strides = [1, 1]} : vector<64x64xf32> to vector<64x32xf32>
    %36 = arith.truncf %29 : vector<64x8xf32> to vector<64x8xbf16>
    %37 = arith.truncf %34 : vector<64x8xf32> to vector<64x8xbf16>
    %cst_15 = arith.constant dense<0.000000e+00> : vector<64x64xf32>
    %38 = tpu.matmul %36, %37, %cst_15 {dimension_numbers = #tpu.dot_dimension_numbers<[1], [1], [0], [0], [0, 0, 1, 0], [], []>} : vector<64x8xbf16>, vector<64x8xbf16>, vector<64x64xf32> -> vector<64x64xf32>
    %c0_16 = arith.constant 0 : index
    %c0_17 = arith.constant 0 : index
    %39 = vector.load %arg7[%c0_16, %c0_17] : memref<64x64xf32, #tpu.memory_space<vmem>>, vector<64x64xf32>
    %40 = arith.addf %38, %39 : vector<64x64xf32>
    %cst_18 = arith.constant dense<0xFF800000> : vector<64xf32>
    %41 = vector.multi_reduction <maximumf>, %40, %cst_18 [1] : vector<64x64xf32> to vector<64xf32>
    %42 = vector.shape_cast %41 : vector<64xf32> to vector<64x1xf32>
    %43 = vector.broadcast %42 : vector<64x1xf32> to vector<64x64xf32>
    %44 = arith.subf %40, %43 : vector<64x64xf32>
    %45 = math.exp %44 : vector<64x64xf32>
    %cst_19 = arith.constant dense<0.000000e+00> : vector<64xf32>
    %46 = vector.multi_reduction <add>, %45, %cst_19 [1] : vector<64x64xf32> to vector<64xf32>
    %47 = vector.shape_cast %46 : vector<64xf32> to vector<64x1xf32>
    %48 = arith.truncf %45 : vector<64x64xf32> to vector<64x64xbf16>
    %49 = arith.truncf %35 : vector<64x32xf32> to vector<64x32xbf16>
    %cst_20 = arith.constant dense<0.000000e+00> : vector<64x32xf32>
    %50 = tpu.matmul %48, %49, %cst_20 {dimension_numbers = #tpu.dot_dimension_numbers<[1], [0], [0], [1], [0, 0, 1, 1], [], []>} : vector<64x64xbf16>, vector<64x32xbf16>, vector<64x32xf32> -> vector<64x32xf32>
    %51 = tpu.reciprocal %47 {approx = true} : vector<64x1xf32> -> vector<64x1xf32>
    %52 = vector.broadcast %51 : vector<64x1xf32> to vector<64x32xf32>
    %53 = arith.mulf %50, %52 : vector<64x32xf32>
    %54 = vector.extract_strided_slice %53 {offsets = [0, 0], sizes = [16, 32], strides = [1, 1]} : vector<64x32xf32> to vector<16x32xf32>
    %55 = vector.extract_strided_slice %53 {offsets = [16, 0], sizes = [16, 32], strides = [1, 1]} : vector<64x32xf32> to vector<16x32xf32>
    %56 = arith.addf %54, %55 : vector<16x32xf32>
    %57 = vector.extract_strided_slice %53 {offsets = [32, 0], sizes = [16, 32], strides = [1, 1]} : vector<64x32xf32> to vector<16x32xf32>
    %58 = arith.addf %56, %57 : vector<16x32xf32>
    %59 = vector.extract_strided_slice %53 {offsets = [48, 0], sizes = [16, 32], strides = [1, 1]} : vector<64x32xf32> to vector<16x32xf32>
    %60 = arith.addf %58, %59 : vector<16x32xf32>
    %61 = arith.truncf %60 : vector<16x32xf32> to vector<16x32xbf16>
    %c0_21 = arith.constant 0 : index
    %c0_22 = arith.constant 0 : index
    %62 = vector.load %arg2[%c0_21, %c0_22] : memref<32x32xbf16, #tpu.memory_space<vmem>>, vector<32x32xbf16>
    %cst_23 = arith.constant dense<0.000000e+00> : vector<16x32xf32>
    %63 = tpu.matmul %61, %62, %cst_23 {dimension_numbers = #tpu.dot_dimension_numbers<[1], [0], [0], [1], [0, 0, 1, 1], [], []>} : vector<16x32xbf16>, vector<32x32xbf16>, vector<16x32xf32> -> vector<16x32xf32>
    %64 = arith.addf %0, %63 : vector<16x32xf32>
    %c1_24 = arith.constant 1 : index
    %c0_25 = arith.constant 0 : index
    %65 = vector.load %arg5[%c1_24, %c0_25] : memref<2x32xf32, #tpu.memory_space<vmem>>, vector<1x32xf32>
    %66 = arith.mulf %64, %64 : vector<16x32xf32>
    %cst_26 = arith.constant dense<0.000000e+00> : vector<16xf32>
    %67 = vector.multi_reduction <add>, %66, %cst_26 [1] : vector<16x32xf32> to vector<16xf32>
    %68 = vector.shape_cast %67 : vector<16xf32> to vector<16x1xf32>
    %cst_27 = arith.constant 3.200000e+01 : f32
    %69 = vector.broadcast %cst_27 : f32 to vector<16x1xf32>
    %70 = arith.divf %68, %69 : vector<16x1xf32>
    %cst_28 = arith.constant 9.99999997E-7 : f32
    %71 = vector.broadcast %cst_28 : f32 to vector<16x1xf32>
    %72 = arith.addf %70, %71 : vector<16x1xf32>
    %73 = math.rsqrt %72 : vector<16x1xf32>
    %74 = vector.broadcast %73 : vector<16x1xf32> to vector<16x32xf32>
    %75 = arith.mulf %64, %74 : vector<16x32xf32>
    %76 = vector.broadcast %65 : vector<1x32xf32> to vector<16x32xf32>
    %77 = arith.mulf %75, %76 : vector<16x32xf32>
    %78 = arith.truncf %77 : vector<16x32xf32> to vector<16x32xbf16>
    %c0_29 = arith.constant 0 : index
    %c0_30 = arith.constant 0 : index
    %79 = vector.load %arg3[%c0_29, %c0_30] : memref<32x256xbf16, #tpu.memory_space<vmem>>, vector<32x256xbf16>
    %cst_31 = arith.constant dense<0.000000e+00> : vector<16x256xf32>
    %80 = tpu.matmul %78, %79, %cst_31 {dimension_numbers = #tpu.dot_dimension_numbers<[1], [0], [0], [1], [0, 0, 1, 1], [], []>} : vector<16x32xbf16>, vector<32x256xbf16>, vector<16x256xf32> -> vector<16x256xf32>
    %81 = vector.extract_strided_slice %80 {offsets = [0, 0], sizes = [16, 128], strides = [1, 1]} : vector<16x256xf32> to vector<16x128xf32>
    %82 = vector.extract_strided_slice %80 {offsets = [0, 128], sizes = [16, 128], strides = [1, 1]} : vector<16x256xf32> to vector<16x128xf32>
    %83 = arith.negf %81 : vector<16x128xf32>
    %84 = math.exp %83 : vector<16x128xf32>
    %cst_32 = arith.constant 1.000000e+00 : f32
    %85 = vector.broadcast %cst_32 : f32 to vector<16x128xf32>
    %86 = arith.addf %85, %84 : vector<16x128xf32>
    %87 = arith.divf %85, %86 : vector<16x128xf32>
    %88 = arith.mulf %81, %87 : vector<16x128xf32>
    %89 = arith.mulf %88, %82 : vector<16x128xf32>
    %90 = arith.truncf %89 : vector<16x128xf32> to vector<16x128xbf16>
    %c0_33 = arith.constant 0 : index
    %c0_34 = arith.constant 0 : index
    %91 = vector.load %arg4[%c0_33, %c0_34] : memref<128x32xbf16, #tpu.memory_space<vmem>>, vector<128x32xbf16>
    %cst_35 = arith.constant dense<0.000000e+00> : vector<16x32xf32>
    %92 = tpu.matmul %90, %91, %cst_35 {dimension_numbers = #tpu.dot_dimension_numbers<[1], [0], [0], [1], [0, 0, 1, 1], [], []>} : vector<16x128xbf16>, vector<128x32xbf16>, vector<16x32xf32> -> vector<16x32xf32>
    %93 = arith.addf %64, %92 : vector<16x32xf32>
    %c0_36 = arith.constant 0 : index
    %c0_37 = arith.constant 0 : index
    %94 = vector.load %arg9[%c0_36, %c0_37] : memref<16x32xf32, #tpu.memory_space<vmem>>, vector<16x32xf32>
    tpu.vector_store %arg9[%c0_36, %c0_37], %93 {strides = array<i32>} : memref<16x32xf32, #tpu.memory_space<vmem>>, vector<16x32xf32>,
    return
  }
}

</mosaic_0001>

<llo_original>
// kernel: transformer_block.1
$region0: #{transformer_block.1}
  #allocation0 [shape = 'u32[]', space=smem, size = 0x4, offset = 0x4, fixed_abs, tag = 'smem constant byte address 0x4 - core index']
  #allocation1 [shape = 'u32[144,128]{1,0:T(1,128)}', space=vmem, size = 0x12000, scoped, tag = 'internal scratch']
  %s0 = inlined_call_operand.vmem [shape: f32[16,32], index: 0, kind: input, shape index: {}]
  %s1 = inlined_call_operand.vmem [shape: bf16[128,64], index: 1, kind: input, shape index: {}]
  %s2 = inlined_call_operand.vmem [shape: bf16[32,32], index: 2, kind: input, shape index: {}]
  %s3 = inlined_call_operand.vmem [shape: bf16[32,256], index: 3, kind: input, shape index: {}]
  %s4 = inlined_call_operand.vmem [shape: bf16[128,32], index: 4, kind: input, shape index: {}]
  %s5 = inlined_call_operand.vmem [shape: f32[2,32], index: 5, kind: input, shape index: {}]
  %s6 = inlined_call_operand.vmem [shape: f32[2,64,8], index: 6, kind: input, shape index: {}]
  %s7 = inlined_call_operand.vmem [shape: f32[64,64], index: 7, kind: input, shape index: {}]
  %s8 = inlined_call_operand.vmem [shape: bf16[64,128], index: 8, kind: input, shape index: {}]
  %s9 = inlined_call_operand.hbm [shape: f32[16,32], index: 9, kind: output, shape index: {}]
  %s10 = sld [smem:[#allocation0]]
  $region46: #{transformer_block.1} parent=0
    _
  %s12 = ssub.s32 1, %s10
  %s13 = scalar_select 0, %s12, %s10
  $region1: #{transformer_block.1} parent=0
    #allocation2 [shape = 'u8[8192]{0}', space=vmem, size = 0x2000, scoped, tag = 'output window, operand 0, single buffered']
    #allocation3 [shape = 's32[1]{0}', space=sflag, size = 0x4, scoped, tag = 'scoped memory for transformer_block.1']
    %14 = vsyncpa [#allocation3], 0
    // Predicated region
    $region2: #{transformer_block.1} parent=1 // pred_check
      _
    $region3: #{transformer_block.1} parent=1 // pred_check_branch
      %16 = sbr.rel (0) target = $region5
    $region4: #{transformer_block.1} parent=1 // pred_region
      _
    $region5: #{transformer_block.1} parent=1 // pred_fallthru
      _
    // Predicated region
    $region6: #{transformer_block.1} parent=1 // pred_check
      _
    $region7: #{transformer_block.1} parent=1 // pred_check_branch
      %18 = sbr.rel (0) target = $region9
    $region8: #{transformer_block.1} parent=1 // pred_region
      _
    $region9: #{transformer_block.1} parent=1 // pred_fallthru
      _
    // Predicated region
    $region10: #{transformer_block.1} parent=1 // pred_check
      _
    $region11: #{transformer_block.1} parent=1 // pred_check_branch
      %20 = sbr.rel (0) target = $region13
    $region12: #{transformer_block.1} parent=1 // pred_region
      _
    $region13: #{transformer_block.1} parent=1 // pred_fallthru
      _
    // Predicated region
    $region14: #{transformer_block.1} parent=1 // pred_check
      _
    $region15: #{transformer_block.1} parent=1 // pred_check_branch
      %22 = sbr.rel (0) target = $region17
    $region16: #{transformer_block.1} parent=1 // pred_region
      _
    $region17: #{transformer_block.1} parent=1 // pred_fallthru
      _
    // Predicated region
    $region18: #{transformer_block.1} parent=1 // pred_check
      _
    $region19: #{transformer_block.1} parent=1 // pred_check_branch
      %24 = sbr.rel (0) target = $region21
    $region20: #{transformer_block.1} parent=1 // pred_region
      _
    $region21: #{transformer_block.1} parent=1 // pred_fallthru
      _
    // Predicated region
    $region22: #{transformer_block.1} parent=1 // pred_check
      _
    $region23: #{transformer_block.1} parent=1 // pred_check_branch
      %26 = sbr.rel (0) target = $region25
    $region24: #{transformer_block.1} parent=1 // pred_region
      _
    $region25: #{transformer_block.1} parent=1 // pred_fallthru
      _
    // Predicated region
    $region26: #{transformer_block.1} parent=1 // pred_check
      _
    $region27: #{transformer_block.1} parent=1 // pred_check_branch
      %28 = sbr.rel (0) target = $region29
    $region28: #{transformer_block.1} parent=1 // pred_region
      _
    $region29: #{transformer_block.1} parent=1 // pred_fallthru
      _
    // Predicated region
    $region30: #{transformer_block.1} parent=1 // pred_check
      _
    $region31: #{transformer_block.1} parent=1 // pred_check_branch
      %30 = sbr.rel (0) target = $region33
    $region32: #{transformer_block.1} parent=1 // pred_region
      _
    $region33: #{transformer_block.1} parent=1 // pred_fallthru
      _
    // Predicated region
    $region34: #{transformer_block.1} parent=1 // pred_check
      _
    $region35: #{transformer_block.1} parent=1 // pred_check_branch
      %32 = sbr.rel (0) target = $region37
    $region36: #{transformer_block.1} parent=1 // pred_region
      _
    $region37: #{transformer_block.1} parent=1 // pred_fallthru
      _
    %v34 = vld [vmem:[%s0] sm:$0xff]
    %v35 = vld [vmem:[%s0 + $0x8] sm:$0xff]
    %v36 = vld [vmem:[%s5] sm:$0x1]
    %v37 = vmul.f32 %v34, %v34
    %v38 = vmul.f32 %v35, %v35
    %vm39 = vcmask 261120
    %v40 = vsel %vm39, %v37, 0.0
    %41 = vadd.xlane.f32.xlu0 %v40
    %v42 = vpop.xlane.xlu0 %41
    %v43 = vsel %vm39, %v38, 0.0
    %44 = vadd.xlane.f32.xlu0 %v43
    %v45 = vpop.xlane.xlu0 %44
    %v46 = vrcp.pop 32.0
    %v47 = vmul.f32 %v42, %v46
    %v48 = vmul.f32 %v45, %v46
    %v49 = vadd.f32 %v47, 1e-06
    %v50 = vadd.f32 %v48, 1e-06
    %v51 = vrsqrt.pop %v49
    %v52 = vrsqrt.pop %v50
    %v53 = vmul.f32 %v34, %v51
    %v54 = vmul.f32 %v35, %v52
    %v55 = vlaneseq
    %v56 = vshrl.u32 %v55, 7
    %v57 = vsub.s32 0, %v56
    %v58 = vrot.slane %v36, %v57
    %v59 = vmul.f32 %v53, %v58
    %v60 = vmul.f32 %v54, %v58
    %v61 = vpack.c.bf16 %v60, %v59
    %63 = vrot.lane.b32.xlu0 %v61, 32
    %v64 = vpop.permute.xlu0 %63
    %65 = vrot.lane.b32.xlu0 %v61, 64
    %v66 = vpop.permute.xlu0 %65
    %67 = vrot.lane.b32.xlu0 %v61, 96
    %v68 = vpop.permute.xlu0 %67
    %v71 = vsel %vm39, %v61, %v64
    %vm72 = vcmask 523264
    %v74 = vsel %vm72, %v71, %v66
    %vm75 = vcmask 785408
    %v77 = vsel %vm75, %v74, %v68
    %v79 = vld [vmem:[%s8] sm:$0xf]
    %v80 = vld [vmem:[%s8 + $0x4] sm:$0xf]
    %v81 = vld [vmem:[%s8 + $0x8] sm:$0xf]
    %v82 = vld [vmem:[%s8 + $0xc] sm:$0xf]
    %v83 = vld [vmem:[%s8 + $0x10] sm:$0xf]
    %v84 = vld [vmem:[%s8 + $0x14] sm:$0xf]
    %v85 = vld [vmem:[%s8 + $0x18] sm:$0xf]
    %v86 = vld [vmem:[%s8 + $0x1c] sm:$0xf]
    %v95 = vunpack.c.l.b16 %v79
    %v96 = vunpack.c.l.b16 %v80
    %v97 = vunpack.c.l.b16 %v81
    %v98 = vunpack.c.l.b16 %v82
    %v99 = vunpack.c.l.b16 %v83
    %v100 = vunpack.c.l.b16 %v84
    %v101 = vunpack.c.l.b16 %v85
    %v102 = vunpack.c.l.b16 %v86
    %v103 = vpack.c.b16 %v96, %v95
    %v104 = vpack.c.b16 %v98, %v97
    %v105 = vpack.c.b16 %v100, %v99
    %v106 = vpack.c.b16 %v102, %v101
    %v111 = vmul.bf16 %v77, %v103
    %v112 = vmul.bf16 %v77, %v104
    %v113 = vmul.bf16 %v77, %v105
    %v114 = vmul.bf16 %v77, %v106
    %v115 = vld [vmem:[%s1] sm:$0xf]
    %v116 = vld [vmem:[%s1 + $0x4] sm:$0xf]
    %v117 = vld [vmem:[%s1 + $0x8] sm:$0xf]
    %v118 = vld [vmem:[%s1 + $0xc] sm:$0xf]
    %v119 = vld [vmem:[%s1 + $0x10] sm:$0xf]
    %v120 = vld [vmem:[%s1 + $0x14] sm:$0xf]
    %v121 = vld [vmem:[%s1 + $0x18] sm:$0xf]
    %v122 = vld [vmem:[%s1 + $0x1c] sm:$0xf]
    %v123 = vld [vmem:[%s1 + $0x20] sm:$0xf]
    %v124 = vld [vmem:[%s1 + $0x24] sm:$0xf]
    %v125 = vld [vmem:[%s1 + $0x28] sm:$0xf]
    %v126 = vld [vmem:[%s1 + $0x2c] sm:$0xf]
    %v127 = vld [vmem:[%s1 + $0x30] sm:$0xf]
    %v128 = vld [vmem:[%s1 + $0x34] sm:$0xf]
    %v129 = vld [vmem:[%s1 + $0x38] sm:$0xf]
    %v130 = vld [vmem:[%s1 + $0x3c] sm:$0xf]
    %v147 = vunpack.c.l.b16 %v115
    %v148 = vunpack.c.l.b16 %v116
    %v149 = vunpack.c.l.b16 %v117
    %v150 = vunpack.c.l.b16 %v118
    %v151 = vunpack.c.l.b16 %v119
    %v152 = vunpack.c.l.b16 %v120
    %v153 = vunpack.c.l.b16 %v121
    %v154 = vunpack.c.l.b16 %v122
    %v155 = vunpack.c.l.b16 %v123
    %v156 = vunpack.c.l.b16 %v124
    %v157 = vunpack.c.l.b16 %v125
    %v158 = vunpack.c.l.b16 %v126
    %v159 = vunpack.c.l.b16 %v127
    %v160 = vunpack.c.l.b16 %v128
    %v161 = vunpack.c.l.b16 %v129
    %v162 = vunpack.c.l.b16 %v130
    %v163 = vpack.c.b16 %v148, %v147
    %v164 = vpack.c.b16 %v150, %v149
    %v165 = vpack.c.b16 %v152, %v151
    %v166 = vpack.c.b16 %v154, %v153
    %v167 = vpack.c.b16 %v156, %v155
    %v168 = vpack.c.b16 %v158, %v157
    %v169 = vpack.c.b16 %v160, %v159
    %v170 = vpack.c.b16 %v162, %v161
    %179 = vmatprep.subr.bf16.mxu0 0
    %180 = vmatpush1.bf16.msra.mxu0 %v163
    %181 = vmatprep.subr.bf16.mxu0 0
    %182 = vmatpush1.bf16.msra.mxu0 %v164
    %183 = vmatprep.subr.bf16.mxu0 0
    %184 = vmatpush1.bf16.msra.mxu0 %v165
    %185 = vmatprep.subr.bf16.mxu0 0
    %186 = vmatpush1.bf16.msra.mxu0 %v166
    %187 = vmatprep.subr.bf16.mxu0 0
    %188 = vmatpush1.bf16.msra.mxu0 %v167
    %189 = vmatprep.subr.bf16.mxu0 0
    %190 = vmatpush1.bf16.msra.mxu0 %v168
    %191 = vmatprep.subr.bf16.mxu0 0
    %192 = vmatpush1.bf16.msra.mxu0 %v169
    %193 = vmatprep.subr.bf16.mxu0 0
    %194 = vmatpush1.bf16.msra.mxu0 %v170
    %195 = vmatprep.subr.bf16.mxu0 0
    %196 = vmatpush1.bf16.msra.mxu0 0
    %197 = vmatprep.subr.bf16.mxu0 0
    %198 = vmatpush1.bf16.msra.mxu0 0
    %199 = vmatprep.subr.bf16.mxu0 0
    %200 = vmatpush1.bf16.msra.mxu0 0
    %201 = vmatprep.subr.bf16.mxu0 0
    %202 = vmatpush1.bf16.msra.mxu0 0
    %203 = vmatprep.subr.bf16.mxu0 0
    %204 = vmatpush1.bf16.msra.mxu0 0
    %205 = vmatprep.subr.bf16.mxu0 0
    %206 = vmatpush1.bf16.msra.mxu0 0
    %207 = vmatprep.subr.bf16.mxu0 0
    %208 = vmatpush1.bf16.msra.mxu0 0
    %209 = vmatprep.subr.bf16.mxu0 0
    %210 = vmatpush1.bf16.msra.mxu0 0
    %211 = vmatprep.mubr.bf16.mxu0 0
    %212 = vmatmul.mubr.bf16.gmra.mrb[0].mxu0 %v111
    %v213 = vpop.f32.mrb[0].mxu0
    %v214 = vadd.f32 0.0, %v213
    %v215 = vpop.f32.mrb[0].mxu0
    %v216 = vpop.f32.mrb[0].mxu0
    %v217 = vadd.f32 0.0, %v216
    %v218 = vpop.f32.mrb[0].mxu0
    %219 = vmatprep.mubr.bf16.mxu0 0
    %220 = vmatmul.mubr.bf16.gmra.mrb[0].mxu0 %v112
    %v221 = vpop.f32.mrb[0].mxu0
    %v222 = vadd.f32 0.0, %v221
    %v223 = vpop.f32.mrb[0].mxu0
    %v224 = vpop.f32.mrb[0].mxu0
    %v225 = vadd.f32 0.0, %v224
    %v226 = vpop.f32.mrb[0].mxu0
    %227 = vmatprep.mubr.bf16.mxu0 0
    %228 = vmatmul.mubr.bf16.gmra.mrb[0].mxu0 %v113
    %v229 = vpop.f32.mrb[0].mxu0
    %v230 = vadd.f32 0.0, %v229
    %v231 = vpop.f32.mrb[0].mxu0
    %v232 = vpop.f32.mrb[0].mxu0
    %v233 = vadd.f32 0.0, %v232
    %v234 = vpop.f32.mrb[0].mxu0
    %235 = vmatprep.mubr.bf16.mxu0 0
    %236 = vmatmul.mubr.bf16.gmra.mrb[0].mxu0 %v114
    %v237 = vpop.f32.mrb[0].mxu0
    %v238 = vadd.f32 0.0, %v237
    %v239 = vpop.f32.mrb[0].mxu0
    %v240 = vpop.f32.mrb[0].mxu0
    %v241 = vadd.f32 0.0, %v240
    %v242 = vpop.f32.mrb[0].mxu0
    %243 = vdwg.mxu0
    %v244 = vld [vmem:[%s6] sm:$0xff]
    %v245 = vld [vmem:[%s6 + $0x8] sm:$0xff]
    %v246 = vld [vmem:[%s6 + $0x10] sm:$0xff]
    %v247 = vld [vmem:[%s6 + $0x18] sm:$0xff]
    %v248 = vld [vmem:[%s6 + $0x20] sm:$0xff]
    %v249 = vld [vmem:[%s6 + $0x28] sm:$0xff]
    %v250 = vld [vmem:[%s6 + $0x30] sm:$0xff]
    %v251 = vld [vmem:[%s6 + $0x38] sm:$0xff]
    %s252 = scalar_lea.vmem %s6, 64
    %v253 = vld [vmem:[%s252] sm:$0xff]
    %v254 = vld [vmem:[%s252 + $0x8] sm:$0xff]
    %v255 = vld [vmem:[%s252 + $0x10] sm:$0xff]
    %v256 = vld [vmem:[%s252 + $0x18] sm:$0xff]
    %v257 = vld [vmem:[%s252 + $0x20] sm:$0xff]
    %v258 = vld [vmem:[%s252 + $0x28] sm:$0xff]
    %v259 = vld [vmem:[%s252 + $0x30] sm:$0xff]
    %v260 = vld [vmem:[%s252 + $0x38] sm:$0xff]
    %v261 = vmul.f32 %v214, %v244
    %v262 = vmul.f32 %v217, %v245
    %v263 = vmul.f32 %v222, %v246
    %v264 = vmul.f32 %v225, %v247
    %v265 = vmul.f32 %v230, %v248
    %v266 = vmul.f32 %v233, %v249
    %v267 = vmul.f32 %v238, %v250
    %v268 = vmul.f32 %v241, %v251
    %277 = vrot.lane.b32.xlu0 %v253, 8
    %v278 = vpop.permute.xlu0 %277
    %279 = vrot.lane.b32.xlu0 %v254, 8
    %v280 = vpop.permute.xlu0 %279
    %281 = vrot.lane.b32.xlu0 %v255, 8
    %v282 = vpop.permute.xlu0 %281
    %283 = vrot.lane.b32.xlu0 %v256, 8
    %v284 = vpop.permute.xlu0 %283
    %285 = vrot.lane.b32.xlu0 %v257, 8
    %v286 = vpop.permute.xlu0 %285
    %287 = vrot.lane.b32.xlu0 %v258, 8
    %v288 = vpop.permute.xlu0 %287
    %289 = vrot.lane.b32.xlu0 %v259, 8
    %v290 = vpop.permute.xlu0 %289
    %291 = vrot.lane.b32.xlu0 %v260, 8
    %v292 = vpop.permute.xlu0 %291
    %v301 = vmul.f32 %v214, %v278
    %v302 = vmul.f32 %v217, %v280
    %v303 = vmul.f32 %v222, %v282
    %v304 = vmul.f32 %v225, %v284
    %v305 = vmul.f32 %v230, %v286
    %v306 = vmul.f32 %v233, %v288
    %v307 = vmul.f32 %v238, %v290
    %v308 = vmul.f32 %v241, %v292
    %317 = vrot.lane.b32.xlu0 %v301, 120
    %v318 = vpop.permute.xlu0 %317
    %319 = vrot.lane.b32.xlu0 %v302, 120
    %v320 = vpop.permute.xlu0 %319
    %321 = vrot.lane.b32.xlu0 %v303, 120
    %v322 = vpop.permute.xlu0 %321
    %323 = vrot.lane.b32.xlu0 %v304, 120
    %v324 = vpop.permute.xlu0 %323
    %325 = vrot.lane.b32.xlu0 %v305, 120
    %v326 = vpop.permute.xlu0 %325
    %327 = vrot.lane.b32.xlu0 %v306, 120
    %v328 = vpop.permute.xlu0 %327
    %329 = vrot.lane.b32.xlu0 %v307, 120
    %v330 = vpop.permute.xlu0 %329
    %331 = vrot.lane.b32.xlu0 %v308, 120
    %v332 = vpop.permute.xlu0 %331
    %v341 = vadd.f32 %v261, %v318
    %v342 = vadd.f32 %v262, %v320
    %v343 = vadd.f32 %v263, %v322
    %v344 = vadd.f32 %v264, %v324
    %v345 = vadd.f32 %v265, %v326
    %v346 = vadd.f32 %v266, %v328
    %v347 = vadd.f32 %v267, %v330
    %v348 = vadd.f32 %v268, %v332
    %357 = vrot.lane.b32.xlu0 %v244, 16
    %v358 = vpop.permute.xlu0 %357
    %359 = vrot.lane.b32.xlu0 %v245, 16
    %v360 = vpop.permute.xlu0 %359
    %361 = vrot.lane.b32.xlu0 %v246, 16
    %v362 = vpop.permute.xlu0 %361
    %363 = vrot.lane.b32.xlu0 %v247, 16
    %v364 = vpop.permute.xlu0 %363
    %365 = vrot.lane.b32.xlu0 %v248, 16
    %v366 = vpop.permute.xlu0 %365
    %367 = vrot.lane.b32.xlu0 %v249, 16
    %v368 = vpop.permute.xlu0 %367
    %369 = vrot.lane.b32.xlu0 %v250, 16
    %v370 = vpop.permute.xlu0 %369
    %371 = vrot.lane.b32.xlu0 %v251, 16
    %v372 = vpop.permute.xlu0 %371
    %v381 = vmul.f32 %v214, %v358
    %v382 = vmul.f32 %v217, %v360
    %v383 = vmul.f32 %v222, %v362
    %v384 = vmul.f32 %v225, %v364
    %v385 = vmul.f32 %v230, %v366
    %v386 = vmul.f32 %v233, %v368
    %v387 = vmul.f32 %v238, %v370
    %v388 = vmul.f32 %v241, %v372
    %389 = vrot.lane.b32.xlu0 %v253, 24
    %v390 = vpop.permute.xlu0 %389
    %391 = vrot.lane.b32.xlu0 %v254, 24
    %v392 = vpop.permute.xlu0 %391
    %393 = vrot.lane.b32.xlu0 %v255, 24
    %v394 = vpop.permute.xlu0 %393
    %395 = vrot.lane.b32.xlu0 %v256, 24
    %v396 = vpop.permute.xlu0 %395
    %397 = vrot.lane.b32.xlu0 %v257, 24
    %v398 = vpop.permute.xlu0 %397
    %399 = vrot.lane.b32.xlu0 %v258, 24
    %v400 = vpop.permute.xlu0 %399
    %401 = vrot.lane.b32.xlu0 %v259, 24
    %v402 = vpop.permute.xlu0 %401
    %403 = vrot.lane.b32.xlu0 %v260, 24
    %v404 = vpop.permute.xlu0 %403
    %v413 = vmul.f32 %v214, %v390
    %v414 = vmul.f32 %v217, %v392
    %v415 = vmul.f32 %v222, %v394
    %v416 = vmul.f32 %v225, %v396
    %v417 = vmul.f32 %v230, %v398
    %v418 = vmul.f32 %v233, %v400
    %v419 = vmul.f32 %v238, %v402
    %v420 = vmul.f32 %v241, %v404
    %429 = vrot.lane.b32.xlu0 %v413, 120
    %v430 = vpop.permute.xlu0 %429
    %431 = vrot.lane.b32.xlu0 %v414, 120
    %v432 = vpop.permute.xlu0 %431
    %433 = vrot.lane.b32.xlu0 %v415, 120
    %v434 = vpop.permute.xlu0 %433
    %435 = vrot.lane.b32.xlu0 %v416, 120
    %v436 = vpop.permute.xlu0 %435
    %437 = vrot.lane.b32.xlu0 %v417, 120
    %v438 = vpop.permute.xlu0 %437
    %439 = vrot.lane.b32.xlu0 %v418, 120
    %v440 = vpop.permute.xlu0 %439
    %441 = vrot.lane.b32.xlu0 %v419, 120
    %v442 = vpop.permute.xlu0 %441
    %443 = vrot.lane.b32.xlu0 %v420, 120
    %v444 = vpop.permute.xlu0 %443
    %v453 = vadd.f32 %v381, %v430
    %v454 = vadd.f32 %v382, %v432
    %v455 = vadd.f32 %v383, %v434
    %v456 = vadd.f32 %v384, %v436
    %v457 = vadd.f32 %v385, %v438
    %v458 = vadd.f32 %v386, %v440
    %v459 = vadd.f32 %v387, %v442
    %v460 = vadd.f32 %v388, %v444
    %v461 = vpack.c.bf16 %v342, %v341
    %v462 = vpack.c.bf16 %v344, %v343
    %v463 = vpack.c.bf16 %v346, %v345
    %v464 = vpack.c.bf16 %v348, %v347
    %v465 = vpack.c.bf16 %v454, %v453
    %v466 = vpack.c.bf16 %v456, %v455
    %v467 = vpack.c.bf16 %v458, %v457
    %v468 = vpack.c.bf16 %v460, %v459
    %v469 = vld [vmem:[%s7] sm:$0xff]
    %v470 = vld [vmem:[%s7 + $0x8] sm:$0xff]
    %v471 = vld [vmem:[%s7 + $0x10] sm:$0xff]
    %v472 = vld [vmem:[%s7 + $0x18] sm:$0xff]
    %v473 = vld [vmem:[%s7 + $0x20] sm:$0xff]
    %v474 = vld [vmem:[%s7 + $0x28] sm:$0xff]
    %v475 = vld [vmem:[%s7 + $0x30] sm:$0xff]
    %v476 = vld [vmem:[%s7 + $0x38] sm:$0xff]
    %481 = vrot.lane.b32.xlu0 %v465, 112
    %v482 = vpop.permute.xlu0 %481
    %483 = vrot.lane.b32.xlu0 %v466, 112
    %v484 = vpop.permute.xlu0 %483
    %485 = vrot.lane.b32.xlu0 %v467, 112
    %v486 = vpop.permute.xlu0 %485
    %487 = vrot.lane.b32.xlu0 %v468, 112
    %v488 = vpop.permute.xlu0 %487
    %vm489 = vcmask 64512
    %v491 = vsel %vm489, %v461, 0
    %v494 = vsel %vm489, %v462, 0
    %v497 = vsel %vm489, %v463, 0
    %v500 = vsel %vm489, %v464, 0
    %v503 = vsel %vm489, %v482, 0
    %v506 = vsel %vm489, %v484, 0
    %v509 = vsel %vm489, %v486, 0
    %v512 = vsel %vm489, %v488, 0
    %514 = vmatprep.subr.bf16.mxu0 0
    %515 = vmatpush1.bf16.xpose.msra.mxu0 %v503
    %516 = vmatprep.subr.bf16.mxu0 0
    %517 = vmatpush1.bf16.xpose.msra.mxu0 %v506
    %518 = vmatprep.subr.bf16.mxu0 0
    %519 = vmatpush1.bf16.xpose.msra.mxu0 %v509
    %520 = vmatprep.subr.bf16.mxu0 0
    %521 = vmatpush1.bf16.xpose.msra.mxu0 %v512
    %522 = vmatprep.subr.bf16.mxu0 0
    %523 = vmatpush1.bf16.xpose.msra.mxu0 0
    %524 = vmatprep.subr.bf16.mxu0 0
    %525 = vmatpush1.bf16.xpose.msra.mxu0 0
    %526 = vmatprep.subr.bf16.mxu0 0
    %527 = vmatpush1.bf16.xpose.msra.mxu0 0
    %528 = vmatprep.subr.bf16.mxu0 0
    %529 = vmatpush1.bf16.xpose.msra.mxu0 0
    %530 = vmatprep.subr.bf16.mxu0 0
    %531 = vmatpush1.bf16.xpose.msra.mxu0 0
    %532 = vmatprep.subr.bf16.mxu0 0
    %533 = vmatpush1.bf16.xpose.msra.mxu0 0
    %534 = vmatprep.subr.bf16.mxu0 0
    %535 = vmatpush1.bf16.xpose.msra.mxu0 0
    %536 = vmatprep.subr.bf16.mxu0 0
    %537 = vmatpush1.bf16.xpose.msra.mxu0 0
    %538 = vmatprep.subr.bf16.mxu0 0
    %539 = vmatpush1.bf16.xpose.msra.mxu0 0
    %540 = vmatprep.subr.bf16.mxu0 0
    %541 = vmatpush1.bf16.xpose.msra.mxu0 0
    %542 = vmatprep.subr.bf16.mxu0 0
    %543 = vmatpush1.bf16.xpose.msra.mxu0 0
    %544 = vmatprep.subr.bf16.mxu0 0
    %545 = vmatpush1.bf16.xpose.msra.mxu0 0
    %546 = vmatprep.mubr.bf16.mxu0 0
    %547 = vmatmul.mubr.bf16.gmra.mrb[0].mxu0 %v491
    %v548 = vpop.f32.mrb[0].mxu0
    %v549 = vadd.f32 %v469, %v548
    %v550 = vpop.f32.mrb[0].mxu0
    %v551 = vpop.f32.mrb[0].mxu0
    %v552 = vadd.f32 %v470, %v551
    %v553 = vpop.f32.mrb[0].mxu0
    %554 = vmatprep.mubr.bf16.mxu0 0
    %555 = vmatmul.mubr.bf16.gmra.mrb[0].mxu0 %v494
    %v556 = vpop.f32.mrb[0].mxu0
    %v557 = vadd.f32 %v471, %v556
    %v558 = vpop.f32.mrb[0].mxu0
    %v559 = vpop.f32.mrb[0].mxu0
    %v560 = vadd.f32 %v472, %v559
    %v561 = vpop.f32.mrb[0].mxu0
    %562 = vmatprep.mubr.bf16.mxu0 0
    %563 = vmatmul.mubr.bf16.gmra.mrb[0].mxu0 %v497
    %v564 = vpop.f32.mrb[0].mxu0
    %v565 = vadd.f32 %v473, %v564
    %v566 = vpop.f32.mrb[0].mxu0
    %v567 = vpop.f32.mrb[0].mxu0
    %v568 = vadd.f32 %v474, %v567
    %v569 = vpop.f32.mrb[0].mxu0
    %570 = vmatprep.mubr.bf16.mxu0 0
    %571 = vmatmul.mubr.bf16.gmra.mrb[0].mxu0 %v500
    %v572 = vpop.f32.mrb[0].mxu0
    %v573 = vadd.f32 %v475, %v572
    %v574 = vpop.f32.mrb[0].mxu0
    %v575 = vpop.f32.mrb[0].mxu0
    %v576 = vadd.f32 %v476, %v575
    %v577 = vpop.f32.mrb[0].mxu0
    %578 = vdwg.mxu0
    %v579 = vsel %vm72, %v549, -inf
    %580 = vmax.xlane.f32.xlu0 %v579
    %v581 = vpop.xlane.xlu0 %580
    %v582 = vsel %vm72, %v552, -inf
    %583 = vmax.xlane.f32.xlu0 %v582
    %v584 = vpop.xlane.xlu0 %583
    %v585 = vsel %vm72, %v557, -inf
    %586 = vmax.xlane.f32.xlu0 %v585
    %v587 = vpop.xlane.xlu0 %586
    %v588 = vsel %vm72, %v560, -inf
    %589 = vmax.xlane.f32.xlu0 %v588
    %v590 = vpop.xlane.xlu0 %589
    %v591 = vsel %vm72, %v565, -inf
    %592 = vmax.xlane.f32.xlu0 %v591
    %v593 = vpop.xlane.xlu0 %592
    %v594 = vsel %vm72, %v568, -inf
    %595 = vmax.xlane.f32.xlu0 %v594
    %v596 = vpop.xlane.xlu0 %595
    %v597 = vsel %vm72, %v573, -inf
    %598 = vmax.xlane.f32.xlu0 %v597
    %v599 = vpop.xlane.xlu0 %598
    %v600 = vsel %vm72, %v576, -inf
    %601 = vmax.xlane.f32.xlu0 %v600
    %v602 = vpop.xlane.xlu0 %601
    %v603 = vsub.f32 %v549, %v581
    %v604 = vsub.f32 %v552, %v584
    %v605 = vsub.f32 %v557, %v587
    %v606 = vsub.f32 %v560, %v590
    %v607 = vsub.f32 %v565, %v593
    %v608 = vsub.f32 %v568, %v596
    %v609 = vsub.f32 %v573, %v599
    %v610 = vsub.f32 %v576, %v602
    %v611 = vmul.f32 %v603, 1.442695
    %v612 = vpow.pop %v611
    %v613 = vmul.f32 %v604, 1.442695
    %v614 = vpow.pop %v613
    %v615 = vmul.f32 %v605, 1.442695
    %v616 = vpow.pop %v615
    %v617 = vmul.f32 %v606, 1.442695
    %v618 = vpow.pop %v617
    %v619 = vmul.f32 %v607, 1.442695
    %v620 = vpow.pop %v619
    %v621 = vmul.f32 %v608, 1.442695
    %v622 = vpow.pop %v621
    %v623 = vmul.f32 %v609, 1.442695
    %v624 = vpow.pop %v623
    %v625 = vmul.f32 %v610, 1.442695
    %v626 = vpow.pop %v625
    %v627 = vsel %vm72, %v612, 0.0
    %628 = vadd.xlane.f32.xlu0 %v627
    %v629 = vpop.xlane.xlu0 %628
    %v630 = vsel %vm72, %v614, 0.0
    %631 = vadd.xlane.f32.xlu0 %v630
    %v632 = vpop.xlane.xlu0 %631
    %v633 = vsel %vm72, %v616, 0.0
    %634 = vadd.xlane.f32.xlu0 %v633
    %v635 = vpop.xlane.xlu0 %634
    %v636 = vsel %vm72, %v618, 0.0
    %637 = vadd.xlane.f32.xlu0 %v636
    %v638 = vpop.xlane.xlu0 %637
    %v639 = vsel %vm72, %v620, 0.0
    %640 = vadd.xlane.f32.xlu0 %v639
    %v641 = vpop.xlane.xlu0 %640
    %v642 = vsel %vm72, %v622, 0.0
    %643 = vadd.xlane.f32.xlu0 %v642
    %v644 = vpop.xlane.xlu0 %643
    %v645 = vsel %vm72, %v624, 0.0
    %646 = vadd.xlane.f32.xlu0 %v645
    %v647 = vpop.xlane.xlu0 %646
    %v648 = vsel %vm72, %v626, 0.0
    %649 = vadd.xlane.f32.xlu0 %v648
    %v650 = vpop.xlane.xlu0 %649
    %v651 = vpack.c.bf16 %v614, %v612
    %v652 = vpack.c.bf16 %v618, %v616
    %v653 = vpack.c.bf16 %v622, %v620
    %v654 = vpack.c.bf16 %v626, %v624
    %v655 = vpack.c.bf16 %v217, %v214
    %v656 = vpack.c.bf16 %v225, %v222
    %v657 = vpack.c.bf16 %v233, %v230
    %v658 = vpack.c.bf16 %v241, %v238
    %663 = vrot.lane.b32.xlu0 %v655, 96
    %v664 = vpop.permute.xlu0 %663
    %665 = vrot.lane.b32.xlu0 %v656, 96
    %v666 = vpop.permute.xlu0 %665
    %667 = vrot.lane.b32.xlu0 %v657, 96
    %v668 = vpop.permute.xlu0 %667
    %669 = vrot.lane.b32.xlu0 %v658, 96
    %v670 = vpop.permute.xlu0 %669
    %v676 = vsel %vm72, %v651, 0
    %v679 = vsel %vm72, %v652, 0
    %v682 = vsel %vm72, %v653, 0
    %v685 = vsel %vm72, %v654, 0
    %687 = vmatprep.subr.bf16.mxu0 0
    %688 = vmatpush1.bf16.msra.mxu0 %v664
    %689 = vmatprep.subr.bf16.mxu0 0
    %690 = vmatpush1.bf16.msra.mxu0 %v666
    %691 = vmatprep.subr.bf16.mxu0 0
    %692 = vmatpush1.bf16.msra.mxu0 %v668
    %693 = vmatprep.subr.bf16.mxu0 0
    %694 = vmatpush1.bf16.msra.mxu0 %v670
    %695 = vmatprep.subr.bf16.mxu0 0
    %696 = vmatpush1.bf16.msra.mxu0 0
    %697 = vmatprep.subr.bf16.mxu0 0
    %698 = vmatpush1.bf16.msra.mxu0 0
    %699 = vmatprep.subr.bf16.mxu0 0
    %700 = vmatpush1.bf16.msra.mxu0 0
    %701 = vmatprep.subr.bf16.mxu0 0
    %702 = vmatpush1.bf16.msra.mxu0 0
    %703 = vmatprep.subr.bf16.mxu0 0
    %704 = vmatpush1.bf16.msra.mxu0 0
    %705 = vmatprep.subr.bf16.mxu0 0
    %706 = vmatpush1.bf16.msra.mxu0 0
    %707 = vmatprep.subr.bf16.mxu0 0
    %708 = vmatpush1.bf16.msra.mxu0 0
    %709 = vmatprep.subr.bf16.mxu0 0
    %710 = vmatpush1.bf16.msra.mxu0 0
    %711 = vmatprep.subr.bf16.mxu0 0
    %712 = vmatpush1.bf16.msra.mxu0 0
    %713 = vmatprep.subr.bf16.mxu0 0
    %714 = vmatpush1.bf16.msra.mxu0 0
    %715 = vmatprep.subr.bf16.mxu0 0
    %716 = vmatpush1.bf16.msra.mxu0 0
    %717 = vmatprep.subr.bf16.mxu0 0
    %718 = vmatpush1.bf16.msra.mxu0 0
    %719 = vmatprep.mubr.bf16.mxu0 0
    %720 = vmatmul.mubr.bf16.gmra.mrb[0].mxu0 %v676
    %v721 = vpop.f32.mrb[0].mxu0
    %v722 = vadd.f32 0.0, %v721
    %v723 = vpop.f32.mrb[0].mxu0
    %v724 = vpop.f32.mrb[0].mxu0
    %v725 = vadd.f32 0.0, %v724
    %v726 = vpop.f32.mrb[0].mxu0
    %727 = vmatprep.mubr.bf16.mxu0 0
    %728 = vmatmul.mubr.bf16.gmra.mrb[0].mxu0 %v679
    %v729 = vpop.f32.mrb[0].mxu0
    %v730 = vadd.f32 0.0, %v729
    %v731 = vpop.f32.mrb[0].mxu0
    %v732 = vpop.f32.mrb[0].mxu0
    %v733 = vadd.f32 0.0, %v732
    %v734 = vpop.f32.mrb[0].mxu0
    %735 = vmatprep.mubr.bf16.mxu0 0
    %736 = vmatmul.mubr.bf16.gmra.mrb[0].mxu0 %v682
    %v737 = vpop.f32.mrb[0].mxu0
    %v738 = vadd.f32 0.0, %v737
    %v739 = vpop.f32.mrb[0].mxu0
    %v740 = vpop.f32.mrb[0].mxu0
    %v741 = vadd.f32 0.0, %v740
    %v742 = vpop.f32.mrb[0].mxu0
    %743 = vmatprep.mubr.bf16.mxu0 0
    %744 = vmatmul.mubr.bf16.gmra.mrb[0].mxu0 %v685
    %v745 = vpop.f32.mrb[0].mxu0
    %v746 = vadd.f32 0.0, %v745
    %v747 = vpop.f32.mrb[0].mxu0
    %v748 = vpop.f32.mrb[0].mxu0
    %v749 = vadd.f32 0.0, %v748
    %v750 = vpop.f32.mrb[0].mxu0
    %751 = vdwg.mxu0
    %v752 = vrcp.pop %v629
    %v753 = vrcp.pop %v632
    %v754 = vrcp.pop %v635
    %v755 = vrcp.pop %v638
    %v756 = vrcp.pop %v641
    %v757 = vrcp.pop %v644
    %v758 = vrcp.pop %v647
    %v759 = vrcp.pop %v650
    %v760 = vmul.f32 %v722, %v752
    %v761 = vmul.f32 %v725, %v753
    %v762 = vmul.f32 %v730, %v754
    %v763 = vmul.f32 %v733, %v755
    %v764 = vmul.f32 %v738, %v756
    %v765 = vmul.f32 %v741, %v757
    %v766 = vmul.f32 %v746, %v758
    %v767 = vmul.f32 %v749, %v759
    %v768 = vadd.f32 %v760, %v762
    %v769 = vadd.f32 %v761, %v763
    %v770 = vadd.f32 %v768, %v764
    %v771 = vadd.f32 %v769, %v765
    %v772 = vadd.f32 %v770, %v766
    %v773 = vadd.f32 %v771, %v767
    %v774 = vpack.c.bf16 %v773, %v772
    %v775 = vld [vmem:[%s2] sm:$0xf]
    %v776 = vld [vmem:[%s2 + $0x4] sm:$0xf]
    %v777 = vld [vmem:[%s2 + $0x8] sm:$0xf]
    %v778 = vld [vmem:[%s2 + $0xc] sm:$0xf]
    %v783 = vunpack.c.l.b16 %v775
    %v784 = vunpack.c.l.b16 %v776
    %v785 = vunpack.c.l.b16 %v777
    %v786 = vunpack.c.l.b16 %v778
    %v787 = vpack.c.b16 %v784, %v783
    %v788 = vpack.c.b16 %v786, %v785
    %v792 = vsel %vm39, %v774, 0
    %794 = vmatprep.subr.bf16.mxu0 0
    %795 = vmatpush1.bf16.msra.mxu0 %v787
    %796 = vmatprep.subr.bf16.mxu0 0
    %797 = vmatpush1.bf16.msra.mxu0 %v788
    %798 = vmatprep.subr.bf16.mxu0 0
    %799 = vmatpush1.bf16.msra.mxu0 0
    %800 = vmatprep.subr.bf16.mxu0 0
    %801 = vmatpush1.bf16.msra.mxu0 0
    %802 = vmatprep.subr.bf16.mxu0 0
    %803 = vmatpush1.bf16.msra.mxu0 0
    %804 = vmatprep.subr.bf16.mxu0 0
    %805 = vmatpush1.bf16.msra.mxu0 0
    %806 = vmatprep.subr.bf16.mxu0 0
    %807 = vmatpush1.bf16.msra.mxu0 0
    %808 = vmatprep.subr.bf16.mxu0 0
    %809 = vmatpush1.bf16.msra.mxu0 0
    %810 = vmatprep.subr.bf16.mxu0 0
    %811 = vmatpush1.bf16.msra.mxu0 0
    %812 = vmatprep.subr.bf16.mxu0 0
    %813 = vmatpush1.bf16.msra.mxu0 0
    %814 = vmatprep.subr.bf16.mxu0 0
    %815 = vmatpush1.bf16.msra.mxu0 0
    %816 = vmatprep.subr.bf16.mxu0 0
    %817 = vmatpush1.bf16.msra.mxu0 0
    %818 = vmatprep.subr.bf16.mxu0 0
    %819 = vmatpush1.bf16.msra.mxu0 0
    %820 = vmatprep.subr.bf16.mxu0 0
    %821 = vmatpush1.bf16.msra.mxu0 0
    %822 = vmatprep.subr.bf16.mxu0 0
    %823 = vmatpush1.bf16.msra.mxu0 0
    %824 = vmatprep.subr.bf16.mxu0 0
    %825 = vmatpush1.bf16.msra.mxu0 0
    %826 = vmatprep.mubr.bf16.mxu0 0
    %827 = vmatmul.mubr.bf16.gmra.mrb[0].mxu0 %v792
    %v828 = vpop.f32.mrb[0].mxu0
    %v829 = vadd.f32 0.0, %v828
    %v830 = vpop.f32.mrb[0].mxu0
    %v831 = vpop.f32.mrb[0].mxu0
    %v832 = vadd.f32 0.0, %v831
    %v833 = vpop.f32.mrb[0].mxu0
    %834 = vdwg.mxu0
    %v835 = vadd.f32 %v34, %v829
    %v836 = vadd.f32 %v35, %v832
    %v837 = vld [vmem:[%s5 + $0x1] sm:$0x1]
    %v838 = vmul.f32 %v835, %v835
    %v839 = vmul.f32 %v836, %v836
    %v840 = vsel %vm39, %v838, 0.0
    %841 = vadd.xlane.f32.xlu0 %v840
    %v842 = vpop.xlane.xlu0 %841
    %v843 = vsel %vm39, %v839, 0.0
    %844 = vadd.xlane.f32.xlu0 %v843
    %v845 = vpop.xlane.xlu0 %844
    %v846 = vmul.f32 %v842, %v46
    %v847 = vmul.f32 %v845, %v46
    %v848 = vadd.f32 %v846, 1e-06
    %v849 = vadd.f32 %v847, 1e-06
    %v850 = vrsqrt.pop %v848
    %v851 = vrsqrt.pop %v849
    %v852 = vmul.f32 %v835, %v850
    %v853 = vmul.f32 %v836, %v851
    %v854 = vlaneseq
    %v855 = vshrl.u32 %v854, 7
    %v856 = vsub.s32 0, %v855
    %v857 = vrot.slane %v837, %v856
    %v858 = vmul.f32 %v852, %v857
    %v859 = vmul.f32 %v853, %v857
    %v860 = vpack.c.bf16 %v859, %v858
    %v861 = vld [vmem:[%s3] sm:$0xff]
    %v862 = vld [vmem:[%s3 + $0x8] sm:$0xff]
    %v863 = vld [vmem:[%s3 + $0x10] sm:$0xff]
    %v864 = vld [vmem:[%s3 + $0x18] sm:$0xff]
    %v869 = vunpack.c.l.b16 %v861
    %v870 = vunpack.c.h.b16 %v861
    %v871 = vunpack.c.l.b16 %v862
    %v872 = vunpack.c.h.b16 %v862
    %v873 = vunpack.c.l.b16 %v863
    %v874 = vunpack.c.h.b16 %v863
    %v875 = vunpack.c.l.b16 %v864
    %v876 = vunpack.c.h.b16 %v864
    %v877 = vpack.c.b16 %v871, %v869
    %v878 = vpack.c.b16 %v872, %v870
    %v879 = vpack.c.b16 %v875, %v873
    %v880 = vpack.c.b16 %v876, %v874
    %v886 = vsel %vm39, %v860, 0
    %888 = vmatprep.subr.bf16.mxu0 %v878
    %889 = vmatpush1.bf16.msra.mxu0 %v877
    %890 = vmatprep.subr.bf16.mxu0 %v880
    %891 = vmatpush1.bf16.msra.mxu0 %v879
    %892 = vmatprep.subr.bf16.mxu0 0
    %893 = vmatpush1.bf16.msra.mxu0 0
    %894 = vmatprep.subr.bf16.mxu0 0
    %895 = vmatpush1.bf16.msra.mxu0 0
    %896 = vmatprep.subr.bf16.mxu0 0
    %897 = vmatpush1.bf16.msra.mxu0 0
    %898 = vmatprep.subr.bf16.mxu0 0
    %899 = vmatpush1.bf16.msra.mxu0 0
    %900 = vmatprep.subr.bf16.mxu0 0
    %901 = vmatpush1.bf16.msra.mxu0 0
    %902 = vmatprep.subr.bf16.mxu0 0
    %903 = vmatpush1.bf16.msra.mxu0 0
    %904 = vmatprep.subr.bf16.mxu0 0
    %905 = vmatpush1.bf16.msra.mxu0 0
    %906 = vmatprep.subr.bf16.mxu0 0
    %907 = vmatpush1.bf16.msra.mxu0 0
    %908 = vmatprep.subr.bf16.mxu0 0
    %909 = vmatpush1.bf16.msra.mxu0 0
    %910 = vmatprep.subr.bf16.mxu0 0
    %911 = vmatpush1.bf16.msra.mxu0 0
    %912 = vmatprep.subr.bf16.mxu0 0
    %913 = vmatpush1.bf16.msra.mxu0 0
    %914 = vmatprep.subr.bf16.mxu0 0
    %915 = vmatpush1.bf16.msra.mxu0 0
    %916 = vmatprep.subr.bf16.mxu0 0
    %917 = vmatpush1.bf16.msra.mxu0 0
    %918 = vmatprep.subr.bf16.mxu0 0
    %919 = vmatpush1.bf16.msra.mxu0 0
    %920 = vmatprep.mubr.bf16.mxu0 0
    %921 = vmatmul.mubr.bf16.gmra.mrb[0].mxu0 %v886
    %v922 = vpop.f32.mrb[0].mxu0
    %v923 = vadd.f32 0.0, %v922
    %v924 = vpop.f32.mrb[0].mxu0
    %v925 = vadd.f32 0.0, %v924
    %v926 = vpop.f32.mrb[0].mxu0
    %v927 = vadd.f32 0.0, %v926
    %v928 = vpop.f32.mrb[0].mxu0
    %v929 = vadd.f32 0.0, %v928
    %930 = vdwg.mxu0
    %v931 = vxor.u32 %v923, 2147483648
    %v932 = vxor.u32 %v927, 2147483648
    %v933 = vmul.f32 %v931, 1.442695
    %v934 = vpow.pop %v933
    %v935 = vmul.f32 %v932, 1.442695
    %v936 = vpow.pop %v935
    %v937 = vadd.f32 %v934, 1.0
    %v938 = vadd.f32 %v936, 1.0
    %v939 = vrcp.pop %v937
    %v940 = vmul.f32 1.0, %v939
    %v941 = vrcp.pop %v938
    %v942 = vmul.f32 1.0, %v941
    %v943 = vmul.f32 %v923, %v940
    %v944 = vmul.f32 %v927, %v942
    %v945 = vmul.f32 %v943, %v925
    %v946 = vmul.f32 %v944, %v929
    %v947 = vpack.c.bf16 %v946, %v945
    %v948 = vld [vmem:[%s4] sm:$0xf]
    %v949 = vld [vmem:[%s4 + $0x4] sm:$0xf]
    %v950 = vld [vmem:[%s4 + $0x8] sm:$0xf]
    %v951 = vld [vmem:[%s4 + $0xc] sm:$0xf]
    %v952 = vld [vmem:[%s4 + $0x10] sm:$0xf]
    %v953 = vld [vmem:[%s4 + $0x14] sm:$0xf]
    %v954 = vld [vmem:[%s4 + $0x18] sm:$0xf]
    %v955 = vld [vmem:[%s4 + $0x1c] sm:$0xf]
    %v956 = vld [vmem:[%s4 + $0x20] sm:$0xf]
    %v957 = vld [vmem:[%s4 + $0x24] sm:$0xf]
    %v958 = vld [vmem:[%s4 + $0x28] sm:$0xf]
    %v959 = vld [vmem:[%s4 + $0x2c] sm:$0xf]
    %v960 = vld [vmem:[%s4 + $0x30] sm:$0xf]
    %v961 = vld [vmem:[%s4 + $0x34] sm:$0xf]
    %v962 = vld [vmem:[%s4 + $0x38] sm:$0xf]
    %v963 = vld [vmem:[%s4 + $0x3c] sm:$0xf]
    %v980 = vunpack.c.l.b16 %v948
    %v981 = vunpack.c.l.b16 %v949
    %v982 = vunpack.c.l.b16 %v950
    %v983 = vunpack.c.l.b16 %v951
    %v984 = vunpack.c.l.b16 %v952
    %v985 = vunpack.c.l.b16 %v953
    %v986 = vunpack.c.l.b16 %v954
    %v987 = vunpack.c.l.b16 %v955
    %v988 = vunpack.c.l.b16 %v956
    %v989 = vunpack.c.l.b16 %v957
    %v990 = vunpack.c.l.b16 %v958
    %v991 = vunpack.c.l.b16 %v959
    %v992 = vunpack.c.l.b16 %v960
    %v993 = vunpack.c.l.b16 %v961
    %v994 = vunpack.c.l.b16 %v962
    %v995 = vunpack.c.l.b16 %v963
    %v996 = vpack.c.b16 %v981, %v980
    %v997 = vpack.c.b16 %v983, %v982
    %v998 = vpack.c.b16 %v985, %v984
    %v999 = vpack.c.b16 %v987, %v986
    %v1000 = vpack.c.b16 %v989, %v988
    %v1001 = vpack.c.b16 %v991, %v990
    %v1002 = vpack.c.b16 %v993, %v992
    %v1003 = vpack.c.b16 %v995, %v994
    %1012 = vmatprep.subr.bf16.mxu0 0
    %1013 = vmatpush1.bf16.msra.mxu0 %v996
    %1014 = vmatprep.subr.bf16.mxu0 0
    %1015 = vmatpush1.bf16.msra.mxu0 %v997
    %1016 = vmatprep.subr.bf16.mxu0 0
    %1017 = vmatpush1.bf16.msra.mxu0 %v998
    %1018 = vmatprep.subr.bf16.mxu0 0
    %1019 = vmatpush1.bf16.msra.mxu0 %v999
    %1020 = vmatprep.subr.bf16.mxu0 0
    %1021 = vmatpush1.bf16.msra.mxu0 %v1000
    %1022 = vmatprep.subr.bf16.mxu0 0
    %1023 = vmatpush1.bf16.msra.mxu0 %v1001
    %1024 = vmatprep.subr.bf16.mxu0 0
    %1025 = vmatpush1.bf16.msra.mxu0 %v1002
    %1026 = vmatprep.subr.bf16.mxu0 0
    %1027 = vmatpush1.bf16.msra.mxu0 %v1003
    %1028 = vmatprep.subr.bf16.mxu0 0
    %1029 = vmatpush1.bf16.msra.mxu0 0
    %1030 = vmatprep.subr.bf16.mxu0 0
    %1031 = vmatpush1.bf16.msra.mxu0 0
    %1032 = vmatprep.subr.bf16.mxu0 0
    %1033 = vmatpush1.bf16.msra.mxu0 0
    %1034 = vmatprep.subr.bf16.mxu0 0
    %1035 = vmatpush1.bf16.msra.mxu0 0
    %1036 = vmatprep.subr.bf16.mxu0 0
    %1037 = vmatpush1.bf16.msra.mxu0 0
    %1038 = vmatprep.subr.bf16.mxu0 0
    %1039 = vmatpush1.bf16.msra.mxu0 0
    %1040 = vmatprep.subr.bf16.mxu0 0
    %1041 = vmatpush1.bf16.msra.mxu0 0
    %1042 = vmatprep.subr.bf16.mxu0 0
    %1043 = vmatpush1.bf16.msra.mxu0 0
    %1044 = vmatprep.mubr.bf16.mxu0 0
    %1045 = vmatmul.mubr.bf16.gmra.mrb[0].mxu0 %v947
    %v1046 = vpop.f32.mrb[0].mxu0
    %v1047 = vadd.f32 0.0, %v1046
    %v1048 = vpop.f32.mrb[0].mxu0
    %v1049 = vpop.f32.mrb[0].mxu0
    %v1050 = vadd.f32 0.0, %v1049
    %v1051 = vpop.f32.mrb[0].mxu0
    %1052 = vdwg.mxu0
    %v1053 = vadd.f32 %v835, %v1047
    %v1054 = vadd.f32 %v836, %v1050
    %1055 = vst.msk [vmem:[#allocation2] sm:$0xff] %vm39, %v1053
    %1056 = vst.msk [vmem:[#allocation2 + $0x8] sm:$0xff] %vm39, %v1054
    // Predicated region
    $region38: #{transformer_block.1} parent=1 // pred_check
      _
    $region39: #{transformer_block.1} parent=1 // pred_check_branch
      %1058 = sbr.rel (0) target = $region41
    $region40: #{transformer_block.1} parent=1 // pred_region
      %s1060 = ssub.s32 256, 256
      %1061 = vsyncadd [#allocation3], %s1060
      %s1062 = sshll.u32 [#allocation2], 4
      %s1063 = int_to_ptr.vmem [resolvable:$true] %s1062
      %1068 = dma.vmem_to_hbm [thread:$0]  %s1063, 256, %s9, [#allocation3], 128, 128, 8
    $region41: #{transformer_block.1} parent=1 // pred_fallthru
      _
    // Predicated region
    $region42: #{transformer_block.1} parent=1 // pred_check
      _
    $region43: #{transformer_block.1} parent=1 // pred_check_branch
      %1070 = sbr.rel (0) target = $region45
    $region44: #{transformer_block.1} parent=1 // pred_region
      %1071 = dma.done [#allocation3], 256
    $region45: #{transformer_block.1} parent=1 // pred_fallthru
      _
    %1072 = vsyncpa [#allocation3], 1

</llo_original>
